<compile_context>
chip_gen: v6e
topology: v6e:2x2x1
jax: 0.10.0
libtpu: 0.0.40
codegen_flags: <defaults>
</compile_context>

<pallas_src>
import jax
import jax.numpy as jnp
from jax.experimental import pallas as pl
from jax.experimental.pallas import tpu as pltpu


def _elu(x):
    # ELU(alpha=1.0), overflow-safe, no compare+select:
    #   x > 0 : exp(min(x,0)) - 1 == 0  -> result is exactly x
    #   x <= 0: max(x,0) == 0           -> result is exp(x) - 1
    return jnp.maximum(x, 0.0) + (jnp.exp(jnp.minimum(x, 0.0)) - 1.0)


def _mlp_kernel(x_ref, w1_ref, w2_ref, w3_ref, b1_ref, b2_ref, b3_ref, o_ref):
    # x_ref:  [tb, D_in]   native layout, one contiguous DMA per tile
    # w1_ref: [H, D_in]    w2_ref: [H, H]    w3_ref: [1, H]   (nn.Linear [out, in])
    # b1_ref: [H, 1] f32   b2_ref: [H, 1] f32   b3_ref: [1, 1] f32 in SMEM
    # o_ref:  [1, tb]      lane-dense output slab (f32)
    x_t = x_ref[...].T                                              # [D_in, tb] (XLU)

    h = jnp.dot(w1_ref[...], x_t, preferred_element_type=jnp.float32)   # [H, tb]
    h = _elu(h + b1_ref[...])                                            # f32 bias + ELU

    h = jnp.dot(w2_ref[...], h.astype(w2_ref.dtype),
                preferred_element_type=jnp.float32)                      # [H, tb]
    h = _elu(h + b2_ref[...])

    o = jnp.dot(w3_ref[...], h.astype(w3_ref.dtype),
                preferred_element_type=jnp.float32)                      # [1, tb]
    o_ref[...] = (o + b3_ref[0, 0]).astype(o_ref.dtype)


def _tensorcores_per_chip():
    """Best-effort TensorCores-per-chip (2 on v7x-class chips, else 1)."""
    try:
        info = pltpu.get_tpu_info()
        for attr in ("num_cores", "num_tensorcores", "tensorcore_count", "core_count"):
            n = getattr(info, attr, None)
            if n:
                return max(int(n), 1)
    except Exception:
        pass
    try:
        n = getattr(jax.devices()[0], "num_cores", None)
        if n:
            return max(int(n), 1)
    except Exception:
        pass
    return 1


def _choose_tb(B, *, max_tb=8192, num_cores=1):
    """Pick a lane-dense batch tile.

    - Single-TC chips (v5e/v6e): the grid is a sequential loop, so use one
      whole-batch step whenever it fits under max_tb (per-step overhead
      dominates this tiny MLP).
    - 2-TC chips (v7x): prefer an even number (>=2) of grid steps for B >= 256
      so both TensorCores get balanced work.
    - The output block puts tb on the lane axis, so tb must be a multiple of
      128 (or equal B); working set at tb=8192 is <2 MiB, so VMEM never binds.
    """
    if B <= 128:
        return B

    def lane_dense_divisors():
        t = (min(B, max_tb) // 128) * 128
        while t >= 128:
            if B % t == 0:
                yield t
            t -= 128

    if num_cores >= 2 and B >= 256:
        for t in lane_dense_divisors():
            steps = B // t
            if steps >= 2 and steps % 2 == 0:
                return t
        # no even lane-dense split; fall through to the best single/odd split

    for t in lane_dense_divisors():
        return t
    return B  # no lane-dense divisor at all: one whole-batch step


def cfr_hypothesis_forward(x, params, *, tb=None, compute_dtype=jnp.bfloat16):
    """x: [B, input_dim] float32 -> [B, 1] float32.

    params are in native nn.Linear layout:
      w1 [H, D_in], b1 [H], w2 [H, H], b2 [H], w3 [1, H], b3 [1]
    """
    w1, b1, w2, b2, w3, b3 = params
    B, D_in = x.shape
    H = w1.shape[0]

    if tb is None:
        tb = _choose_tb(B, num_cores=_tensorcores_per_chip())
    assert B % tb == 0

    cd = compute_dtype
    xc = x.astype(cd)                               # dominant HBM stream: bf16 by default
    w1c = w1.astype(cd)
    w2c = w2.astype(cd)
    w3c = w3.reshape(1, H).astype(cd)
    b1c = b1.reshape(H, 1).astype(jnp.float32)      # biases / ELU stay f32
    b2c = b2.reshape(H, 1).astype(jnp.float32)
    b3s = b3.reshape(1, 1).astype(jnp.float32)      # SMEM scalar

    out = pl.pallas_call(
        _mlp_kernel,
        out_shape=jax.ShapeDtypeStruct((1, B), jnp.float32),
        grid_spec=pltpu.PrefetchScalarGridSpec(
            num_scalar_prefetch=0,
            grid=(B // tb,),
            in_specs=[
                pl.BlockSpec((tb, D_in), lambda i: (i, 0)),          # x tile (native layout)
                pl.BlockSpec((H, D_in), lambda i: (0, 0)),           # W1 [out, in]
                pl.BlockSpec((H, H), lambda i: (0, 0)),              # W2
                pl.BlockSpec((1, H), lambda i: (0, 0)),              # W3
                pl.BlockSpec((H, 1), lambda i: (0, 0)),              # b1
                pl.BlockSpec((H, 1), lambda i: (0, 0)),              # b2
                pl.BlockSpec(memory_space=pltpu.MemorySpace.SMEM),   # b3 scalar
            ],
            out_specs=pl.BlockSpec((1, tb), lambda i: (0, i)),       # lane-dense output slab
        ),
        compiler_params=pltpu.CompilerParams(
            dimension_semantics=("parallel",),
        ),
    )(xc, w1c, w2c, w3c, b1c, b2c, b3s)

    return out.reshape(B, 1)


def init_params(key, input_dim, hidden_dim):
    """Deterministic synthetic parameters in native nn.Linear [out, in] layout."""
    k1, k2, k3, k4, k5, k6 = jax.random.split(key, 6)
    w1 = jax.random.normal(k1, (hidden_dim, input_dim), jnp.float32) * 0.1
    b1 = jax.random.normal(k2, (hidden_dim,), jnp.float32) * 0.1
    w2 = jax.random.normal(k3, (hidden_dim, hidden_dim), jnp.float32) * 0.1
    b2 = jax.random.normal(k4, (hidden_dim,), jnp.float32) * 0.1
    w3 = jax.random.normal(k5, (1, hidden_dim), jnp.float32) * 0.1
    b3 = jax.random.normal(k6, (1,), jnp.float32) * 0.1
    return (w1, b1, w2, b2, w3, b3)


def reference_forward(x, params):
    w1, b1, w2, b2, w3, b3 = params
    h = _elu(x @ w1.T + b1)
    h = _elu(h @ w2.T + b2)
    return h @ w3.T + b3


if __name__ == "__main__":
    INPUT_DIM = 16
    HIDDEN_DIM = 32
    BATCH = 256   # lane-dense; 1 step on single-TC chips, 2x128 on 2-TC chips

    key = jax.random.PRNGKey(0)
    kx, kp = jax.random.split(key)
    x = jax.random.normal(kx, (BATCH, INPUT_DIM), jnp.float32)
    params = init_params(kp, INPUT_DIM, HIDDEN_DIM)

    ref = reference_forward(x, params)

    # Full-f32 path: strict check of the kernel's logic against the reference.
    out_f32 = jax.block_until_ready(
        cfr_hypothesis_forward(x, params, compute_dtype=jnp.float32))
    assert out_f32.shape == (BATCH, 1)
    assert jnp.allclose(out_f32, ref, atol=1e-5, rtol=1e-5)

    # Default bf16 input/weight path (halves HBM traffic; f32 accumulation):
    # documented looser tolerance vs the fp32 reference.
    out_bf16 = jax.block_until_ready(cfr_hypothesis_forward(x, params))
    assert out_bf16.shape == (BATCH, 1)
    assert jnp.allclose(out_bf16, ref, atol=3e-2, rtol=3e-2)

    print("KERNEL_OK")
</pallas_src>

<mosaic_0001>
module attributes {stable_mosaic.version = 11 : i64} {
  func.func @_mlp_kernel(%arg0: i32, %arg1: memref<256x16xf32, #tpu.memory_space<vmem>>, %arg2: memref<32x16xf32, #tpu.memory_space<vmem>>, %arg3: memref<32x32xf32, #tpu.memory_space<vmem>>, %arg4: memref<1x32xf32, #tpu.memory_space<vmem>>, %arg5: memref<32x1xf32, #tpu.memory_space<vmem>>, %arg6: memref<32x1xf32, #tpu.memory_space<vmem>>, %arg7: memref<1x1xf32, #tpu.memory_space<smem>>, %arg8: memref<1x256xf32, #tpu.memory_space<vmem>>) attributes {dimension_semantics = [#tpu.dimension_semantics<parallel>], iteration_bounds = array<i64: 1>, scalar_prefetch = 0 : i64, scratch_operands = 0 : i64, tpu.core_type = #tpu.core_type<tc>, window_params = [{transform_indices = @transform_0, window_bounds = array<i64: 256, 16>}, {pipeline_mode = #tpu.pipeline_mode<synchronous>, transform_indices = @transform_1, window_bounds = array<i64: 32, 16>}, {pipeline_mode = #tpu.pipeline_mode<synchronous>, transform_indices = @transform_2, window_bounds = array<i64: 32, 32>}, {pipeline_mode = #tpu.pipeline_mode<synchronous>, transform_indices = @transform_3, window_bounds = array<i64: 1, 32>}, {pipeline_mode = #tpu.pipeline_mode<synchronous>, transform_indices = @transform_4, window_bounds = array<i64: 32, 1>}, {pipeline_mode = #tpu.pipeline_mode<synchronous>, transform_indices = @transform_5, window_bounds = array<i64: 32, 1>}, {transform_indices = @transform_6, window_bounds = array<i64: 1, 1>}, {transform_indices = @transform_7, window_bounds = array<i64: 1, 256>}]} {
    %c0 = arith.constant 0 : index
    %c0_0 = arith.constant 0 : index
    %0 = vector.load %arg1[%c0, %c0_0] : memref<256x16xf32, #tpu.memory_space<vmem>>, vector<256x16xf32>
    %1 = tpu.transpose %0, [1, 0] : vector<256x16xf32> -> vector<16x256xf32>
    %c0_1 = arith.constant 0 : index
    %c0_2 = arith.constant 0 : index
    %2 = vector.load %arg2[%c0_1, %c0_2] : memref<32x16xf32, #tpu.memory_space<vmem>>, vector<32x16xf32>
    %cst = arith.constant dense<0.000000e+00> : vector<32x256xf32>
    %3 = tpu.matmul %2, %1, %cst {dimension_numbers = #tpu.dot_dimension_numbers<[1], [0], [0], [1], [0, 0, 1, 1], [], []>} : vector<32x16xf32>, vector<16x256xf32>, vector<32x256xf32> -> vector<32x256xf32>
    %c0_3 = arith.constant 0 : index
    %c0_4 = arith.constant 0 : index
    %4 = vector.load %arg5[%c0_3, %c0_4] : memref<32x1xf32, #tpu.memory_space<vmem>>, vector<32x1xf32>
    %5 = vector.broadcast %4 : vector<32x1xf32> to vector<32x256xf32>
    %6 = arith.addf %3, %5 : vector<32x256xf32>
    %cst_5 = arith.constant 0.000000e+00 : f32
    %7 = vector.broadcast %cst_5 : f32 to vector<32x256xf32>
    %8 = arith.maximumf %6, %7 : vector<32x256xf32>
    %cst_6 = arith.constant 0.000000e+00 : f32
    %9 = vector.broadcast %cst_6 : f32 to vector<32x256xf32>
    %10 = arith.minimumf %6, %9 : vector<32x256xf32>
    %11 = math.exp %10 : vector<32x256xf32>
    %cst_7 = arith.constant 1.000000e+00 : f32
    %12 = vector.broadcast %cst_7 : f32 to vector<32x256xf32>
    %13 = arith.subf %11, %12 : vector<32x256xf32>
    %14 = arith.addf %8, %13 : vector<32x256xf32>
    %c0_8 = arith.constant 0 : index
    %c0_9 = arith.constant 0 : index
    %15 = vector.load %arg3[%c0_8, %c0_9] : memref<32x32xf32, #tpu.memory_space<vmem>>, vector<32x32xf32>
    %cst_10 = arith.constant dense<0.000000e+00> : vector<32x256xf32>
    %16 = tpu.matmul %15, %14, %cst_10 {dimension_numbers = #tpu.dot_dimension_numbers<[1], [0], [0], [1], [0, 0, 1, 1], [], []>} : vector<32x32xf32>, vector<32x256xf32>, vector<32x256xf32> -> vector<32x256xf32>
    %c0_11 = arith.constant 0 : index
    %c0_12 = arith.constant 0 : index
    %17 = vector.load %arg6[%c0_11, %c0_12] : memref<32x1xf32, #tpu.memory_space<vmem>>, vector<32x1xf32>
    %18 = vector.broadcast %17 : vector<32x1xf32> to vector<32x256xf32>
    %19 = arith.addf %16, %18 : vector<32x256xf32>
    %cst_13 = arith.constant 0.000000e+00 : f32
    %20 = vector.broadcast %cst_13 : f32 to vector<32x256xf32>
    %21 = arith.maximumf %19, %20 : vector<32x256xf32>
    %cst_14 = arith.constant 0.000000e+00 : f32
    %22 = vector.broadcast %cst_14 : f32 to vector<32x256xf32>
    %23 = arith.minimumf %19, %22 : vector<32x256xf32>
    %24 = math.exp %23 : vector<32x256xf32>
    %cst_15 = arith.constant 1.000000e+00 : f32
    %25 = vector.broadcast %cst_15 : f32 to vector<32x256xf32>
    %26 = arith.subf %24, %25 : vector<32x256xf32>
    %27 = arith.addf %21, %26 : vector<32x256xf32>
    %c0_16 = arith.constant 0 : index
    %c0_17 = arith.constant 0 : index
    %28 = vector.load %arg4[%c0_16, %c0_17] : memref<1x32xf32, #tpu.memory_space<vmem>>, vector<1x32xf32>
    %cst_18 = arith.constant dense<0.000000e+00> : vector<1x256xf32>
    %29 = tpu.matmul %28, %27, %cst_18 {dimension_numbers = #tpu.dot_dimension_numbers<[1], [0], [0], [1], [0, 0, 1, 1], [], []>} : vector<1x32xf32>, vector<32x256xf32>, vector<1x256xf32> -> vector<1x256xf32>
    %c0_19 = arith.constant 0 : index
    %c0_20 = arith.constant 0 : index
    %30 = memref.load %arg7[%c0_19, %c0_20] : memref<1x1xf32, #tpu.memory_space<smem>>
    %31 = vector.broadcast %30 : f32 to vector<1x256xf32>
    %32 = arith.addf %29, %31 : vector<1x256xf32>
    %c0_21 = arith.constant 0 : index
    %c0_22 = arith.constant 0 : index
    %33 = vector.load %arg8[%c0_21, %c0_22] : memref<1x256xf32, #tpu.memory_space<vmem>>, vector<1x256xf32>
    tpu.vector_store %arg8[%c0_21, %c0_22], %32 {strides = array<i32>} : memref<1x256xf32, #tpu.memory_space<vmem>>, vector<1x256xf32>,
    return
  }
  func.func @transform_0(%arg0: i32) -> (i32, i32) {
    %c0_i32 = arith.constant 0 : i32
    %c0_i32_0 = arith.constant 0 : i32
    return %arg0, %c0_i32 : i32, i32
  }
  func.func @transform_1(%arg0: i32) -> (i32, i32) {
    %c0_i32 = arith.constant 0 : i32
    %c0_i32_0 = arith.constant 0 : i32
    %c0_i32_1 = arith.constant 0 : i32
    return %c0_i32, %c0_i32_0 : i32, i32
  }
  func.func @transform_2(%arg0: i32) -> (i32, i32) {
    %c0_i32 = arith.constant 0 : i32
    %c0_i32_0 = arith.constant 0 : i32
    %c0_i32_1 = arith.constant 0 : i32
    return %c0_i32, %c0_i32_0 : i32, i32
  }
  func.func @transform_3(%arg0: i32) -> (i32, i32) {
    %c0_i32 = arith.constant 0 : i32
    %c0_i32_0 = arith.constant 0 : i32
    %c0_i32_1 = arith.constant 0 : i32
    return %c0_i32, %c0_i32_0 : i32, i32
  }
  func.func @transform_4(%arg0: i32) -> (i32, i32) {
    %c0_i32 = arith.constant 0 : i32
    %c0_i32_0 = arith.constant 0 : i32
    %c0_i32_1 = arith.constant 0 : i32
    return %c0_i32, %c0_i32_0 : i32, i32
  }
  func.func @transform_5(%arg0: i32) -> (i32, i32) {
    %c0_i32 = arith.constant 0 : i32
    %c0_i32_0 = arith.constant 0 : i32
    %c0_i32_1 = arith.constant 0 : i32
    return %c0_i32, %c0_i32_0 : i32, i32
  }
  func.func @transform_6(%arg0: i32) -> (i32, i32) {
    %c0_i32 = arith.constant 0 : i32
    %c0_i32_0 = arith.constant 0 : i32
    %c0_i32_1 = arith.constant 0 : i32
    return %c0_i32, %c0_i32_0 : i32, i32
  }
  func.func @transform_7(%arg0: i32) -> (i32, i32) {
    %c0_i32 = arith.constant 0 : i32
    %c0_i32_0 = arith.constant 0 : i32
    return %c0_i32, %arg0 : i32, i32
  }
}

</mosaic_0001>

<llo_original>
// kernel: tpu_custom_call.1
$region0: #{tpu_custom_call.1}
  #allocation0 [shape = 'u32[]', space=smem, size = 0x4, offset = 0x4, fixed_abs, tag = 'smem constant byte address 0x4 - core index']
  #allocation1 [shape = 'u32[144,128]{1,0:T(1,128)}', space=vmem, size = 0x12000, scoped, tag = 'internal scratch']
  #allocation2 [shape = 'f32[1,1]{1,0:T(1,128)S(6)}', space=smem, size = 0x200, scoped, tag = 'scoped memory for tpu_custom_call.1']
  %s0 = inlined_call_operand.vmem [shape: f32[256,16], index: 0, kind: input, shape index: {}]
  %s1 = inlined_call_operand.vmem [shape: f32[32,16], index: 1, kind: input, shape index: {}]
  %s2 = inlined_call_operand.vmem [shape: f32[32,32], index: 2, kind: input, shape index: {}]
  %s3 = inlined_call_operand.vmem [shape: f32[1,32], index: 3, kind: input, shape index: {}]
  %s4 = inlined_call_operand.vmem [shape: f32[32,1], index: 4, kind: input, shape index: {}]
  %s5 = inlined_call_operand.vmem [shape: f32[32,1], index: 5, kind: input, shape index: {}]
  %s6 = inlined_call_operand.<no memory space> [shape: f32[1,1], index: 6, kind: input, shape index: {}]
  %s7 = inlined_call_operand.hbm [shape: f32[1,256], index: 7, kind: output, shape index: {}]
  %s8 = sld [smem:[#allocation0]]
  $region38: #{tpu_custom_call.1} parent=0
    _
  %s10 = ssub.s32 1, %s8
  %s11 = scalar_select 0, %s10, %s8
  %12 = sst [smem:[#allocation2]] %s6
  $region1: #{tpu_custom_call.1} parent=0
    #allocation3 [shape = 'u8[1024]{0}', space=vmem, size = 0x400, scoped, tag = 'output window, operand 0, single buffered']
    #allocation4 [shape = 's32[1]{0}', space=sflag, size = 0x4, scoped, tag = 'scoped memory for tpu_custom_call.1']
    %13 = vsyncpa [#allocation4], 0
    // Predicated region
    $region2: #{tpu_custom_call.1} parent=1 // pred_check
      _
    $region3: #{tpu_custom_call.1} parent=1 // pred_check_branch
      %15 = sbr.rel (0) target = $region5
    $region4: #{tpu_custom_call.1} parent=1 // pred_region
      _
    $region5: #{tpu_custom_call.1} parent=1 // pred_fallthru
      _
    // Predicated region
    $region6: #{tpu_custom_call.1} parent=1 // pred_check
      _
    $region7: #{tpu_custom_call.1} parent=1 // pred_check_branch
      %17 = sbr.rel (0) target = $region9
    $region8: #{tpu_custom_call.1} parent=1 // pred_region
      _
    $region9: #{tpu_custom_call.1} parent=1 // pred_fallthru
      _
    // Predicated region
    $region10: #{tpu_custom_call.1} parent=1 // pred_check
      _
    $region11: #{tpu_custom_call.1} parent=1 // pred_check_branch
      %19 = sbr.rel (0) target = $region13
    $region12: #{tpu_custom_call.1} parent=1 // pred_region
      _
    $region13: #{tpu_custom_call.1} parent=1 // pred_fallthru
      _
    // Predicated region
    $region14: #{tpu_custom_call.1} parent=1 // pred_check
      _
    $region15: #{tpu_custom_call.1} parent=1 // pred_check_branch
      %21 = sbr.rel (0) target = $region17
    $region16: #{tpu_custom_call.1} parent=1 // pred_region
      _
    $region17: #{tpu_custom_call.1} parent=1 // pred_fallthru
      _
    // Predicated region
    $region18: #{tpu_custom_call.1} parent=1 // pred_check
      _
    $region19: #{tpu_custom_call.1} parent=1 // pred_check_branch
      %23 = sbr.rel (0) target = $region21
    $region20: #{tpu_custom_call.1} parent=1 // pred_region
      _
    $region21: #{tpu_custom_call.1} parent=1 // pred_fallthru
      _
    // Predicated region
    $region22: #{tpu_custom_call.1} parent=1 // pred_check
      _
    $region23: #{tpu_custom_call.1} parent=1 // pred_check_branch
      %25 = sbr.rel (0) target = $region25
    $region24: #{tpu_custom_call.1} parent=1 // pred_region
      _
    $region25: #{tpu_custom_call.1} parent=1 // pred_fallthru
      _
    // Predicated region
    $region26: #{tpu_custom_call.1} parent=1 // pred_check
      _
    $region27: #{tpu_custom_call.1} parent=1 // pred_check_branch
      %27 = sbr.rel (0) target = $region29
    $region28: #{tpu_custom_call.1} parent=1 // pred_region
      _
    $region29: #{tpu_custom_call.1} parent=1 // pred_fallthru
      _
    %v28 = vld [vmem:[%s0] sm:$0xff]
    %v29 = vld [vmem:[%s0 + $0x8] sm:$0xff]
    %v30 = vld [vmem:[%s0 + $0x10] sm:$0xff]
    %v31 = vld [vmem:[%s0 + $0x18] sm:$0xff]
    %v32 = vld [vmem:[%s0 + $0x20] sm:$0xff]
    %v33 = vld [vmem:[%s0 + $0x28] sm:$0xff]
    %v34 = vld [vmem:[%s0 + $0x30] sm:$0xff]
    %v35 = vld [vmem:[%s0 + $0x38] sm:$0xff]
    %v36 = vld [vmem:[%s0 + $0x40] sm:$0xff]
    %v37 = vld [vmem:[%s0 + $0x48] sm:$0xff]
    %v38 = vld [vmem:[%s0 + $0x50] sm:$0xff]
    %v39 = vld [vmem:[%s0 + $0x58] sm:$0xff]
    %v40 = vld [vmem:[%s0 + $0x60] sm:$0xff]
    %v41 = vld [vmem:[%s0 + $0x68] sm:$0xff]
    %v42 = vld [vmem:[%s0 + $0x70] sm:$0xff]
    %v43 = vld [vmem:[%s0 + $0x78] sm:$0xff]
    %v44 = vld [vmem:[%s0 + $0x80] sm:$0xff]
    %v45 = vld [vmem:[%s0 + $0x88] sm:$0xff]
    %v46 = vld [vmem:[%s0 + $0x90] sm:$0xff]
    %v47 = vld [vmem:[%s0 + $0x98] sm:$0xff]
    %v48 = vld [vmem:[%s0 + $0xa0] sm:$0xff]
    %v49 = vld [vmem:[%s0 + $0xa8] sm:$0xff]
    %v50 = vld [vmem:[%s0 + $0xb0] sm:$0xff]
    %v51 = vld [vmem:[%s0 + $0xb8] sm:$0xff]
    %v52 = vld [vmem:[%s0 + $0xc0] sm:$0xff]
    %v53 = vld [vmem:[%s0 + $0xc8] sm:$0xff]
    %v54 = vld [vmem:[%s0 + $0xd0] sm:$0xff]
    %v55 = vld [vmem:[%s0 + $0xd8] sm:$0xff]
    %v56 = vld [vmem:[%s0 + $0xe0] sm:$0xff]
    %v57 = vld [vmem:[%s0 + $0xe8] sm:$0xff]
    %v58 = vld [vmem:[%s0 + $0xf0] sm:$0xff]
    %v59 = vld [vmem:[%s0 + $0xf8] sm:$0xff]
    %v60 = vld [vmem:[%s1] sm:$0xff]
    %v61 = vld [vmem:[%s1 + $0x8] sm:$0xff]
    %v62 = vld [vmem:[%s1 + $0x10] sm:$0xff]
    %v63 = vld [vmem:[%s1 + $0x18] sm:$0xff]
    %v64 = vld [vmem:[%s4] sm:$0xff]
    %v65 = vld [vmem:[%s4 + $0x8] sm:$0xff]
    %v66 = vld [vmem:[%s4 + $0x10] sm:$0xff]
    %v67 = vld [vmem:[%s4 + $0x18] sm:$0xff]
    %69 = vset.pattern.permute.xlu0 0
    %70 = vperm.xlu0 %69, %v64
    %v71 = vpop.permute.xlu0 %70
    %74 = vset.pattern.permute.xlu0 0
    %75 = vperm.xlu0 %74, %v65
    %v76 = vpop.permute.xlu0 %75
    %79 = vset.pattern.permute.xlu0 0
    %80 = vperm.xlu0 %79, %v66
    %v81 = vpop.permute.xlu0 %80
    %84 = vset.pattern.permute.xlu0 0
    %85 = vperm.xlu0 %84, %v67
    %v86 = vpop.permute.xlu0 %85
    %vm88 = vcmask 130048
    %v90 = vsel %vm88, %v60, 0
    %v93 = vsel %vm88, %v61, 0
    %v96 = vsel %vm88, %v62, 0
    %v99 = vsel %vm88, %v63, 0
    %v102 = vsel %vm88, %v28, 0
    %v105 = vsel %vm88, %v29, 0
    %v108 = vsel %vm88, %v30, 0
    %v111 = vsel %vm88, %v31, 0
    %v114 = vsel %vm88, %v32, 0
    %v117 = vsel %vm88, %v33, 0
    %v120 = vsel %vm88, %v34, 0
    %v123 = vsel %vm88, %v35, 0
    %v126 = vsel %vm88, %v36, 0
    %v129 = vsel %vm88, %v37, 0
    %v132 = vsel %vm88, %v38, 0
    %v135 = vsel %vm88, %v39, 0
    %v138 = vsel %vm88, %v40, 0
    %v141 = vsel %vm88, %v41, 0
    %v144 = vsel %vm88, %v42, 0
    %v147 = vsel %vm88, %v43, 0
    %v150 = vsel %vm88, %v44, 0
    %v153 = vsel %vm88, %v45, 0
    %v156 = vsel %vm88, %v46, 0
    %v159 = vsel %vm88, %v47, 0
    %v162 = vsel %vm88, %v48, 0
    %v165 = vsel %vm88, %v49, 0
    %v168 = vsel %vm88, %v50, 0
    %v171 = vsel %vm88, %v51, 0
    %v174 = vsel %vm88, %v52, 0
    %v177 = vsel %vm88, %v53, 0
    %v180 = vsel %vm88, %v54, 0
    %v183 = vsel %vm88, %v55, 0
    %v186 = vsel %vm88, %v56, 0
    %v189 = vsel %vm88, %v57, 0
    %v192 = vsel %vm88, %v58, 0
    %v195 = vsel %vm88, %v59, 0
    %197 = vmatprep.subr.mxu0 0.0
    %198 = vmatpush1.xpose.msra.mxu0 %v147
    %199 = vmatprep.subr.mxu0 0.0
    %200 = vmatpush1.xpose.msra.mxu0 %v144
    %201 = vmatprep.subr.mxu0 0.0
    %202 = vmatpush1.xpose.msra.mxu0 %v141
    %203 = vmatprep.subr.mxu0 0.0
    %204 = vmatpush1.xpose.msra.mxu0 %v138
    %205 = vmatprep.subr.mxu0 0.0
    %206 = vmatpush1.xpose.msra.mxu0 %v135
    %207 = vmatprep.subr.mxu0 0.0
    %208 = vmatpush1.xpose.msra.mxu0 %v132
    %209 = vmatprep.subr.mxu0 0.0
    %210 = vmatpush1.xpose.msra.mxu0 %v129
    %211 = vmatprep.subr.mxu0 0.0
    %212 = vmatpush1.xpose.msra.mxu0 %v126
    %213 = vmatprep.subr.mxu0 0.0
    %214 = vmatpush1.xpose.msra.mxu0 %v123
    %215 = vmatprep.subr.mxu0 0.0
    %216 = vmatpush1.xpose.msra.mxu0 %v120
    %217 = vmatprep.subr.mxu0 0.0
    %218 = vmatpush1.xpose.msra.mxu0 %v117
    %219 = vmatprep.subr.mxu0 0.0
    %220 = vmatpush1.xpose.msra.mxu0 %v114
    %221 = vmatprep.subr.mxu0 0.0
    %222 = vmatpush1.xpose.msra.mxu0 %v111
    %223 = vmatprep.subr.mxu0 0.0
    %224 = vmatpush1.xpose.msra.mxu0 %v108
    %225 = vmatprep.subr.mxu0 0.0
    %226 = vmatpush1.xpose.msra.mxu0 %v105
    %227 = vmatprep.subr.mxu0 0.0
    %228 = vmatpush1.xpose.msra.mxu0 %v102
    %229 = vmatprep.subr.mxu0 0.0
    %230 = vmatpush2.xpose.msra.mxu0 %v195
    %231 = vmatprep.subr.mxu0 0.0
    %232 = vmatpush2.xpose.msra.mxu0 %v192
    %233 = vmatprep.subr.mxu0 0.0
    %234 = vmatpush2.xpose.msra.mxu0 %v189
    %235 = vmatprep.subr.mxu0 0.0
    %236 = vmatpush2.xpose.msra.mxu0 %v186
    %237 = vmatprep.subr.mxu0 0.0
    %238 = vmatpush2.xpose.msra.mxu0 %v183
    %239 = vmatprep.subr.mxu0 0.0
    %240 = vmatpush2.xpose.msra.mxu0 %v180
    %241 = vmatprep.subr.mxu0 0.0
    %242 = vmatpush2.xpose.msra.mxu0 %v177
    %243 = vmatprep.subr.mxu0 0.0
    %244 = vmatpush2.xpose.msra.mxu0 %v174
    %245 = vmatprep.subr.mxu0 0.0
    %246 = vmatpush2.xpose.msra.mxu0 %v171
    %247 = vmatprep.subr.mxu0 0.0
    %248 = vmatpush2.xpose.msra.mxu0 %v168
    %249 = vmatprep.subr.mxu0 0.0
    %250 = vmatpush2.xpose.msra.mxu0 %v165
    %251 = vmatprep.subr.mxu0 0.0
    %252 = vmatpush2.xpose.msra.mxu0 %v162
    %253 = vmatprep.subr.mxu0 0.0
    %254 = vmatpush2.xpose.msra.mxu0 %v159
    %255 = vmatprep.subr.mxu0 0.0
    %256 = vmatpush2.xpose.msra.mxu0 %v156
    %257 = vmatprep.subr.mxu0 0.0
    %258 = vmatpush2.xpose.msra.mxu0 %v153
    %259 = vmatprep.subr.mxu0 0.0
    %260 = vmatpush2.xpose.msra.mxu0 %v150
    %261 = vmatprep.mubr.f32.mxu0 0.0
    %262 = vmatmul.mubr.f32.gmra.mxu0 %v90
    %v263 = vpop.f32.mrf.mxu0
    %v264 = vadd.f32 %v71, %v263
    %v265 = vpop.f32.mrf.mxu0
    %v266 = vadd.f32 %v71, %v265
    %267 = vmatprep.mubr.f32.mxu0 0.0
    %268 = vmatmul.mubr.f32.gmra.mxu0 %v93
    %v269 = vpop.f32.mrf.mxu0
    %v270 = vadd.f32 %v76, %v269
    %v271 = vpop.f32.mrf.mxu0
    %v272 = vadd.f32 %v76, %v271
    %273 = vmatprep.mubr.f32.mxu0 0.0
    %274 = vmatmul.mubr.f32.gmra.mxu0 %v96
    %v275 = vpop.f32.mrf.mxu0
    %v276 = vadd.f32 %v81, %v275
    %v277 = vpop.f32.mrf.mxu0
    %v278 = vadd.f32 %v81, %v277
    %279 = vmatprep.mubr.f32.mxu0 0.0
    %280 = vmatmul.mubr.f32.gmra.mxu0 %v99
    %v281 = vpop.f32.mrf.mxu0
    %v282 = vadd.f32 %v86, %v281
    %v283 = vpop.f32.mrf.mxu0
    %v284 = vadd.f32 %v86, %v283
    %285 = vdwg.mxu0
    %v286 = vmax.f32 %v264, 0.0
    %v287 = vmax.f32 %v266, 0.0
    %v288 = vmax.f32 %v270, 0.0
    %v289 = vmax.f32 %v272, 0.0
    %v290 = vmax.f32 %v276, 0.0
    %v291 = vmax.f32 %v278, 0.0
    %v292 = vmax.f32 %v282, 0.0
    %v293 = vmax.f32 %v284, 0.0
    %v294 = vmin.f32 %v264, 0.0
    %v295 = vmin.f32 %v266, 0.0
    %v296 = vmin.f32 %v270, 0.0
    %v297 = vmin.f32 %v272, 0.0
    %v298 = vmin.f32 %v276, 0.0
    %v299 = vmin.f32 %v278, 0.0
    %v300 = vmin.f32 %v282, 0.0
    %v301 = vmin.f32 %v284, 0.0
    %v302 = vmul.f32 %v294, 1.442695
    %v303 = vpow.pop %v302
    %v304 = vmul.f32 %v295, 1.442695
    %v305 = vpow.pop %v304
    %v306 = vmul.f32 %v296, 1.442695
    %v307 = vpow.pop %v306
    %v308 = vmul.f32 %v297, 1.442695
    %v309 = vpow.pop %v308
    %v310 = vmul.f32 %v298, 1.442695
    %v311 = vpow.pop %v310
    %v312 = vmul.f32 %v299, 1.442695
    %v313 = vpow.pop %v312
    %v314 = vmul.f32 %v300, 1.442695
    %v315 = vpow.pop %v314
    %v316 = vmul.f32 %v301, 1.442695
    %v317 = vpow.pop %v316
    %v318 = vsub.f32 %v303, 1.0
    %v319 = vsub.f32 %v305, 1.0
    %v320 = vsub.f32 %v307, 1.0
    %v321 = vsub.f32 %v309, 1.0
    %v322 = vsub.f32 %v311, 1.0
    %v323 = vsub.f32 %v313, 1.0
    %v324 = vsub.f32 %v315, 1.0
    %v325 = vsub.f32 %v317, 1.0
    %v326 = vadd.f32 %v286, %v318
    %v327 = vadd.f32 %v287, %v319
    %v328 = vadd.f32 %v288, %v320
    %v329 = vadd.f32 %v289, %v321
    %v330 = vadd.f32 %v290, %v322
    %v331 = vadd.f32 %v291, %v323
    %v332 = vadd.f32 %v292, %v324
    %v333 = vadd.f32 %v293, %v325
    %v334 = vld [vmem:[%s2] sm:$0xff]
    %v335 = vld [vmem:[%s2 + $0x8] sm:$0xff]
    %v336 = vld [vmem:[%s2 + $0x10] sm:$0xff]
    %v337 = vld [vmem:[%s2 + $0x18] sm:$0xff]
    %v338 = vld [vmem:[%s5] sm:$0xff]
    %v339 = vld [vmem:[%s5 + $0x8] sm:$0xff]
    %v340 = vld [vmem:[%s5 + $0x10] sm:$0xff]
    %v341 = vld [vmem:[%s5 + $0x18] sm:$0xff]
    %343 = vset.pattern.permute.xlu0 0
    %344 = vperm.xlu0 %343, %v338
    %v345 = vpop.permute.xlu0 %344
    %348 = vset.pattern.permute.xlu0 0
    %349 = vperm.xlu0 %348, %v339
    %v350 = vpop.permute.xlu0 %349
    %353 = vset.pattern.permute.xlu0 0
    %354 = vperm.xlu0 %353, %v340
    %v355 = vpop.permute.xlu0 %354
    %358 = vset.pattern.permute.xlu0 0
    %359 = vperm.xlu0 %358, %v341
    %v360 = vpop.permute.xlu0 %359
    %vm362 = vcmask 261120
    %v364 = vsel %vm362, %v334, 0
    %v367 = vsel %vm362, %v335, 0
    %v370 = vsel %vm362, %v336, 0
    %v373 = vsel %vm362, %v337, 0
    %375 = vmatprep.subr.mxu0 0.0
    %376 = vmatpush1.msra.mxu0 0.0
    %377 = vmatprep.subr.mxu0 0.0
    %378 = vmatpush1.msra.mxu0 0.0
    %379 = vmatprep.subr.mxu0 0.0
    %380 = vmatpush1.msra.mxu0 0.0
    %381 = vmatprep.subr.mxu0 0.0
    %382 = vmatpush1.msra.mxu0 0.0
    %383 = vmatprep.subr.mxu0 0.0
    %384 = vmatpush1.msra.mxu0 0.0
    %385 = vmatprep.subr.mxu0 0.0
    %386 = vmatpush1.msra.mxu0 0.0
    %387 = vmatprep.subr.mxu0 0.0
    %388 = vmatpush1.msra.mxu0 0.0
    %389 = vmatprep.subr.mxu0 0.0
    %390 = vmatpush1.msra.mxu0 0.0
    %391 = vmatprep.subr.mxu0 0.0
    %392 = vmatpush1.msra.mxu0 0.0
    %393 = vmatprep.subr.mxu0 0.0
    %394 = vmatpush1.msra.mxu0 0.0
    %395 = vmatprep.subr.mxu0 0.0
    %396 = vmatpush1.msra.mxu0 0.0
    %397 = vmatprep.subr.mxu0 0.0
    %398 = vmatpush1.msra.mxu0 0.0
    %399 = vmatprep.subr.mxu0 %v333
    %400 = vmatpush1.msra.mxu0 %v332
    %401 = vmatprep.subr.mxu0 %v331
    %402 = vmatpush1.msra.mxu0 %v330
    %403 = vmatprep.subr.mxu0 %v329
    %404 = vmatpush1.msra.mxu0 %v328
    %405 = vmatprep.subr.mxu0 %v327
    %406 = vmatpush1.msra.mxu0 %v326
    %407 = vmatprep.subr.mxu0 0.0
    %408 = vmatpush2.msra.mxu0 0.0
    %409 = vmatprep.subr.mxu0 0.0
    %410 = vmatpush2.msra.mxu0 0.0
    %411 = vmatprep.subr.mxu0 0.0
    %412 = vmatpush2.msra.mxu0 0.0
    %413 = vmatprep.subr.mxu0 0.0
    %414 = vmatpush2.msra.mxu0 0.0
    %415 = vmatprep.subr.mxu0 0.0
    %416 = vmatpush2.msra.mxu0 0.0
    %417 = vmatprep.subr.mxu0 0.0
    %418 = vmatpush2.msra.mxu0 0.0
    %419 = vmatprep.subr.mxu0 0.0
    %420 = vmatpush2.msra.mxu0 0.0
    %421 = vmatprep.subr.mxu0 0.0
    %422 = vmatpush2.msra.mxu0 0.0
    %423 = vmatprep.subr.mxu0 0.0
    %424 = vmatpush2.msra.mxu0 0.0
    %425 = vmatprep.subr.mxu0 0.0
    %426 = vmatpush2.msra.mxu0 0.0
    %427 = vmatprep.subr.mxu0 0.0
    %428 = vmatpush2.msra.mxu0 0.0
    %429 = vmatprep.subr.mxu0 0.0
    %430 = vmatpush2.msra.mxu0 0.0
    %431 = vmatprep.subr.mxu0 0.0
    %432 = vmatpush2.msra.mxu0 0.0
    %433 = vmatprep.subr.mxu0 0.0
    %434 = vmatpush2.msra.mxu0 0.0
    %435 = vmatprep.subr.mxu0 0.0
    %436 = vmatpush2.msra.mxu0 0.0
    %437 = vmatprep.subr.mxu0 0.0
    %438 = vmatpush2.msra.mxu0 0.0
    %439 = vmatprep.mubr.f32.mxu0 0.0
    %440 = vmatmul.mubr.f32.gmra.mxu0 %v364
    %v441 = vpop.f32.mrf.mxu0
    %v442 = vadd.f32 %v345, %v441
    %v443 = vpop.f32.mrf.mxu0
    %v444 = vadd.f32 %v345, %v443
    %445 = vmatprep.mubr.f32.mxu0 0.0
    %446 = vmatmul.mubr.f32.gmra.mxu0 %v367
    %v447 = vpop.f32.mrf.mxu0
    %v448 = vadd.f32 %v350, %v447
    %v449 = vpop.f32.mrf.mxu0
    %v450 = vadd.f32 %v350, %v449
    %451 = vmatprep.mubr.f32.mxu0 0.0
    %452 = vmatmul.mubr.f32.gmra.mxu0 %v370
    %v453 = vpop.f32.mrf.mxu0
    %v454 = vadd.f32 %v355, %v453
    %v455 = vpop.f32.mrf.mxu0
    %v456 = vadd.f32 %v355, %v455
    %457 = vmatprep.mubr.f32.mxu0 0.0
    %458 = vmatmul.mubr.f32.gmra.mxu0 %v373
    %v459 = vpop.f32.mrf.mxu0
    %v460 = vadd.f32 %v360, %v459
    %v461 = vpop.f32.mrf.mxu0
    %v462 = vadd.f32 %v360, %v461
    %463 = vdwg.mxu0
    %v464 = vmax.f32 %v442, 0.0
    %v465 = vmax.f32 %v444, 0.0
    %v466 = vmax.f32 %v448, 0.0
    %v467 = vmax.f32 %v450, 0.0
    %v468 = vmax.f32 %v454, 0.0
    %v469 = vmax.f32 %v456, 0.0
    %v470 = vmax.f32 %v460, 0.0
    %v471 = vmax.f32 %v462, 0.0
    %v472 = vmin.f32 %v442, 0.0
    %v473 = vmin.f32 %v444, 0.0
    %v474 = vmin.f32 %v448, 0.0
    %v475 = vmin.f32 %v450, 0.0
    %v476 = vmin.f32 %v454, 0.0
    %v477 = vmin.f32 %v456, 0.0
    %v478 = vmin.f32 %v460, 0.0
    %v479 = vmin.f32 %v462, 0.0
    %v480 = vmul.f32 %v472, 1.442695
    %v481 = vpow.pop %v480
    %v482 = vmul.f32 %v473, 1.442695
    %v483 = vpow.pop %v482
    %v484 = vmul.f32 %v474, 1.442695
    %v485 = vpow.pop %v484
    %v486 = vmul.f32 %v475, 1.442695
    %v487 = vpow.pop %v486
    %v488 = vmul.f32 %v476, 1.442695
    %v489 = vpow.pop %v488
    %v490 = vmul.f32 %v477, 1.442695
    %v491 = vpow.pop %v490
    %v492 = vmul.f32 %v478, 1.442695
    %v493 = vpow.pop %v492
    %v494 = vmul.f32 %v479, 1.442695
    %v495 = vpow.pop %v494
    %v496 = vsub.f32 %v481, 1.0
    %v497 = vsub.f32 %v483, 1.0
    %v498 = vsub.f32 %v485, 1.0
    %v499 = vsub.f32 %v487, 1.0
    %v500 = vsub.f32 %v489, 1.0
    %v501 = vsub.f32 %v491, 1.0
    %v502 = vsub.f32 %v493, 1.0
    %v503 = vsub.f32 %v495, 1.0
    %v504 = vadd.f32 %v464, %v496
    %v505 = vadd.f32 %v465, %v497
    %v506 = vadd.f32 %v466, %v498
    %v507 = vadd.f32 %v467, %v499
    %v508 = vadd.f32 %v468, %v500
    %v509 = vadd.f32 %v469, %v501
    %v510 = vadd.f32 %v470, %v502
    %v511 = vadd.f32 %v471, %v503
    %v512 = vld [vmem:[%s3] sm:$0x1]
    %s513 = sld [smem:[#allocation2]]
    %v514 = vstv %s513
    %v516 = vsel %vm362, %v512, 0
    %518 = vmatprep.subr.mxu0 0.0
    %519 = vmatpush1.msra.mxu0 0.0
    %520 = vmatprep.subr.mxu0 0.0
    %521 = vmatpush1.msra.mxu0 0.0
    %522 = vmatprep.subr.mxu0 0.0
    %523 = vmatpush1.msra.mxu0 0.0
    %524 = vmatprep.subr.mxu0 0.0
    %525 = vmatpush1.msra.mxu0 0.0
    %526 = vmatprep.subr.mxu0 0.0
    %527 = vmatpush1.msra.mxu0 0.0
    %528 = vmatprep.subr.mxu0 0.0
    %529 = vmatpush1.msra.mxu0 0.0
    %530 = vmatprep.subr.mxu0 0.0
    %531 = vmatpush1.msra.mxu0 0.0
    %532 = vmatprep.subr.mxu0 0.0
    %533 = vmatpush1.msra.mxu0 0.0
    %534 = vmatprep.subr.mxu0 0.0
    %535 = vmatpush1.msra.mxu0 0.0
    %536 = vmatprep.subr.mxu0 0.0
    %537 = vmatpush1.msra.mxu0 0.0
    %538 = vmatprep.subr.mxu0 0.0
    %539 = vmatpush1.msra.mxu0 0.0
    %540 = vmatprep.subr.mxu0 0.0
    %541 = vmatpush1.msra.mxu0 0.0
    %542 = vmatprep.subr.mxu0 %v511
    %543 = vmatpush1.msra.mxu0 %v510
    %544 = vmatprep.subr.mxu0 %v509
    %545 = vmatpush1.msra.mxu0 %v508
    %546 = vmatprep.subr.mxu0 %v507
    %547 = vmatpush1.msra.mxu0 %v506
    %548 = vmatprep.subr.mxu0 %v505
    %549 = vmatpush1.msra.mxu0 %v504
    %550 = vmatprep.subr.mxu0 0.0
    %551 = vmatpush2.msra.mxu0 0.0
    %552 = vmatprep.subr.mxu0 0.0
    %553 = vmatpush2.msra.mxu0 0.0
    %554 = vmatprep.subr.mxu0 0.0
    %555 = vmatpush2.msra.mxu0 0.0
    %556 = vmatprep.subr.mxu0 0.0
    %557 = vmatpush2.msra.mxu0 0.0
    %558 = vmatprep.subr.mxu0 0.0
    %559 = vmatpush2.msra.mxu0 0.0
    %560 = vmatprep.subr.mxu0 0.0
    %561 = vmatpush2.msra.mxu0 0.0
    %562 = vmatprep.subr.mxu0 0.0
    %563 = vmatpush2.msra.mxu0 0.0
    %564 = vmatprep.subr.mxu0 0.0
    %565 = vmatpush2.msra.mxu0 0.0
    %566 = vmatprep.subr.mxu0 0.0
    %567 = vmatpush2.msra.mxu0 0.0
    %568 = vmatprep.subr.mxu0 0.0
    %569 = vmatpush2.msra.mxu0 0.0
    %570 = vmatprep.subr.mxu0 0.0
    %571 = vmatpush2.msra.mxu0 0.0
    %572 = vmatprep.subr.mxu0 0.0
    %573 = vmatpush2.msra.mxu0 0.0
    %574 = vmatprep.subr.mxu0 0.0
    %575 = vmatpush2.msra.mxu0 0.0
    %576 = vmatprep.subr.mxu0 0.0
    %577 = vmatpush2.msra.mxu0 0.0
    %578 = vmatprep.subr.mxu0 0.0
    %579 = vmatpush2.msra.mxu0 0.0
    %580 = vmatprep.subr.mxu0 0.0
    %581 = vmatpush2.msra.mxu0 0.0
    %582 = vmatprep.mubr.f32.mxu0 0.0
    %583 = vmatmul.mubr.f32.gmra.mxu0 %v516
    %v584 = vpop.f32.mrf.mxu0
    %v585 = vadd.f32 %v514, %v584
    %v586 = vpop.f32.mrf.mxu0
    %v587 = vadd.f32 %v514, %v586
    %588 = vdwg.mxu0
    %v591 = vcombine.low %v585, %v587
    %v593 = vunpack.c.l.s4 1966171168
    %v594 = vunpack.c.0.s8 %v593
    %v595 = vlaneseq
    %v596 = vshrl.u32 %v595, 7
    %v597 = vsub.s32 %v594, %v596
    %v598 = vrot.slane %v591, %v597
    %v600 = vunpack.c.l.s4 1966171168
    %v601 = vunpack.c.0.s8 %v600
    %v602 = vlaneseq
    %v603 = vshrl.u32 %v602, 7
    %v604 = vsub.s32 %v601, %v603
    %v605 = vrot.slane %v598, %v604
    %v607 = vlaneseq
    %vm608 = vcmp.ge.s32.totalorder %v607, 0
    %vm609 = vcmp.lt.s32.totalorder %v607, 256
    %vm610 = vmand %vm608, %vm609
    %611 = vst.msk [vmem:[#allocation3] sm:$0x3] %vm610, %v605
    // Predicated region
    $region30: #{tpu_custom_call.1} parent=1 // pred_check
      _
    $region31: #{tpu_custom_call.1} parent=1 // pred_check_branch
      %613 = sbr.rel (0) target = $region33
    $region32: #{tpu_custom_call.1} parent=1 // pred_region
      %s615 = ssub.s32 32, 32
      %616 = vsyncadd [#allocation4], %s615
      %s618 = sshll.u32 [#allocation3], 4
      %s619 = int_to_ptr.vmem [resolvable:$true] %s618
      %621 = dma.vmem_to_hbm [thread:$0]  %s619, 32, %s7, [#allocation4]
    $region33: #{tpu_custom_call.1} parent=1 // pred_fallthru
      _
    // Predicated region
    $region34: #{tpu_custom_call.1} parent=1 // pred_check
      _
    $region35: #{tpu_custom_call.1} parent=1 // pred_check_branch
      %623 = sbr.rel (0) target = $region37
    $region36: #{tpu_custom_call.1} parent=1 // pred_region
      %624 = dma.done [#allocation4], 32
    $region37: #{tpu_custom_call.1} parent=1 // pred_fallthru
      _
    %625 = vsyncpa [#allocation4], 1

</llo_original>
